<compile_context>
chip_gen: v7x
topology: tpu7x:2x2x1
jax: 0.10.0
libtpu: 0.0.40
codegen_flags: <defaults>
</compile_context>

<pallas_src>
import jax
import jax.numpy as jnp
from jax.experimental import pallas as pl
from jax.experimental.pallas import tpu as pltpu


def _conv1x1_bn_kernel(x_ref, w_ref, b_ref, o_ref):
    # x_ref: (Cin, HWp)   w_ref: (Cout, Cin)   b_ref: (Cout, 1)   o_ref: (Cout, HWp)
    y = jnp.dot(w_ref[...], x_ref[...], preferred_element_type=jnp.float32)
    o_ref[...] = (y + b_ref[...]).astype(o_ref.dtype)


def adjust_layer_forward(x, w, gamma, beta, mean, var, eps=1e-5):
    """One AdjustLayer: 1x1 conv (no bias) + BatchNorm2d (eval) + center crop.

    x: (N, Cin, H, W) f32,  w: (Cout, Cin),  gamma/beta/mean/var: (Cout,).
    """
    N, Cin, H, W = x.shape
    Cout = w.shape[0]

    # --- fuse BN (eval mode) into the 1x1 conv ---
    scale = gamma * jax.lax.rsqrt(var + eps)                  # (Cout,)
    w_eff = (w * scale[:, None]).astype(jnp.float32)          # (Cout, Cin)
    b_eff = (beta - mean * scale).reshape(Cout, 1).astype(jnp.float32)

    # --- crop BEFORE the conv (1x1 conv is pointwise in space, so this is
    #     mathematically identical to PyTorch's conv -> bn -> crop) ---
    if W < 20:
        l, r = 4, 11
        x = x[:, :, l:r, l:r]
        H, W = r - l, r - l

    HW = H * W
    HWp = ((HW + 127) // 128) * 128          # lane-dense padding
    x_flat = x.reshape(N, Cin, HW)
    if HWp != HW:
        x_flat = jnp.pad(x_flat, ((0, 0), (0, 0), (0, HWp - HW)))

    # --- explicit VMEM budget: double-buffered in + out tiles + params ---
    itemsize = x_flat.dtype.itemsize
    vmem_bytes = 2 * (Cin + Cout) * HWp * itemsize + 2 * (Cout * Cin + Cout) * 4
    vmem_bytes = int(min(max(vmem_bytes + (1 << 20), 4 << 20), 32 << 20))

    out_flat = pl.pallas_call(
        _conv1x1_bn_kernel,
        out_shape=jax.ShapeDtypeStruct((N, Cout, HWp), x_flat.dtype),
        grid_spec=pltpu.PrefetchScalarGridSpec(
            num_scalar_prefetch=0,
            grid=(N,),
            in_specs=[
                pl.BlockSpec((pl.Squeezed(), Cin, HWp), lambda n: (n, 0, 0)),
                pl.BlockSpec((Cout, Cin), lambda n: (0, 0)),
                pl.BlockSpec((Cout, 1), lambda n: (0, 0)),
            ],
            out_specs=pl.BlockSpec((pl.Squeezed(), Cout, HWp), lambda n: (n, 0, 0)),
        ),
        compiler_params=pltpu.CompilerParams(
            dimension_semantics=("parallel",),
            vmem_limit_bytes=vmem_bytes,
        ),
    )(x_flat, w_eff, b_eff)

    return out_flat[:, :, :HW].reshape(N, Cout, H, W)


def adjust_all_layer_forward(features, params):
    """AdjustAllLayer forward.

    features: single array (num==1) or list of arrays.
    params:   list of tuples (w, gamma, beta, mean, var), one per branch.
    """
    if isinstance(features, (list, tuple)):
        return [adjust_layer_forward(f, *p) for f, p in zip(features, params)]
    return adjust_layer_forward(features, *params[0])


# ----------------------------- pure-JAX reference ---------------------------

def adjust_layer_reference(x, w, gamma, beta, mean, var, eps=1e-5):
    y = jnp.einsum('oc,nchw->nohw', w, x)
    s = (gamma * jax.lax.rsqrt(var + eps))[None, :, None, None]
    y = (y - mean[None, :, None, None]) * s + beta[None, :, None, None]
    if y.shape[3] < 20:
        y = y[:, :, 4:11, 4:11]
    return y


if __name__ == "__main__":
    key = jax.random.PRNGKey(0)

    # AdjustAllLayer(in_channels=[16, 32], out_channels=[8, 8])  -> multi-branch path.
    # Branch 0 (16x16 feature map) exercises the <20 center crop; branch 1 (24x24) does not.
    in_channels = [16, 32]
    out_channels = [8, 8]
    spatials = [16, 24]
    N = 2

    feats, params = [], []
    for cin, cout, hw in zip(in_channels, out_channels, spatials):
        key, kx, kw, kg, kb, km, kv = jax.random.split(key, 7)
        feats.append(jax.random.normal(kx, (N, cin, hw, hw), dtype=jnp.float32))
        w = jax.random.normal(kw, (cout, cin), dtype=jnp.float32) * (1.0 / cin) ** 0.5
        gamma = 1.0 + 0.1 * jax.random.normal(kg, (cout,), dtype=jnp.float32)
        beta = 0.1 * jax.random.normal(kb, (cout,), dtype=jnp.float32)
        mean = 0.1 * jax.random.normal(km, (cout,), dtype=jnp.float32)
        var = jnp.abs(1.0 + 0.1 * jax.random.normal(kv, (cout,), dtype=jnp.float32))
        params.append((w, gamma, beta, mean, var))

    outs = adjust_all_layer_forward(feats, params)
    outs = jax.block_until_ready(outs)

    refs = [adjust_layer_reference(f, *p) for f, p in zip(feats, params)]

    assert outs[0].shape == (N, out_channels[0], 7, 7)      # cropped branch
    assert outs[1].shape == (N, out_channels[1], 24, 24)    # uncropped branch
    for o, r in zip(outs, refs):
        assert jnp.allclose(o, r, atol=1e-4, rtol=1e-4), "mismatch vs reference"

    print("KERNEL_OK")
</pallas_src>

<mosaic_0001>
module attributes {stable_mosaic.version = 11 : i64} {
  func.func @_conv1x1_bn_kernel(%arg0: i32, %arg1: memref<1x16x128xf32, #tpu.memory_space<vmem>>, %arg2: memref<8x16xf32, #tpu.memory_space<vmem>>, %arg3: memref<8x1xf32, #tpu.memory_space<vmem>>, %arg4: memref<1x8x128xf32, #tpu.memory_space<vmem>>) attributes {dimension_semantics = [#tpu.dimension_semantics<parallel>], iteration_bounds = array<i64: 2>, scalar_prefetch = 0 : i64, scratch_operands = 0 : i64, tpu.core_type = #tpu.core_type<tc>, window_params = [{transform_indices = @transform_0, window_bounds = array<i64: 1, 16, 128>}, {pipeline_mode = #tpu.pipeline_mode<synchronous>, transform_indices = @transform_1, window_bounds = array<i64: 8, 16>}, {pipeline_mode = #tpu.pipeline_mode<synchronous>, transform_indices = @transform_2, window_bounds = array<i64: 8, 1>}, {transform_indices = @transform_3, window_bounds = array<i64: 1, 8, 128>}]} {
    %c0 = arith.constant 0 : index
    %c0_0 = arith.constant 0 : index
    %0 = vector.load %arg2[%c0, %c0_0] : memref<8x16xf32, #tpu.memory_space<vmem>>, vector<8x16xf32>
    %c0_1 = arith.constant 0 : index
    %c0_2 = arith.constant 0 : index
    %c0_3 = arith.constant 0 : index
    %1 = vector.load %arg1[%c0_1, %c0_2, %c0_3] : memref<1x16x128xf32, #tpu.memory_space<vmem>>, vector<1x16x128xf32>
    %2 = vector.shape_cast %1 : vector<1x16x128xf32> to vector<16x128xf32>
    %cst = arith.constant dense<0.000000e+00> : vector<8x128xf32>
    %3 = tpu.matmul %0, %2, %cst {dimension_numbers = #tpu.dot_dimension_numbers<[1], [0], [0], [1], [0, 0, 1, 1], [], []>} : vector<8x16xf32>, vector<16x128xf32>, vector<8x128xf32> -> vector<8x128xf32>
    %c0_4 = arith.constant 0 : index
    %c0_5 = arith.constant 0 : index
    %4 = vector.load %arg3[%c0_4, %c0_5] : memref<8x1xf32, #tpu.memory_space<vmem>>, vector<8x1xf32>
    %5 = vector.broadcast %4 : vector<8x1xf32> to vector<8x128xf32>
    %6 = arith.addf %3, %5 : vector<8x128xf32>
    %c0_6 = arith.constant 0 : index
    %c0_7 = arith.constant 0 : index
    %c0_8 = arith.constant 0 : index
    %7 = vector.load %arg4[%c0_6, %c0_7, %c0_8] : memref<1x8x128xf32, #tpu.memory_space<vmem>>, vector<1x8x128xf32>
    %8 = vector.shape_cast %7 : vector<1x8x128xf32> to vector<8x128xf32>
    %9 = vector.shape_cast %6 : vector<8x128xf32> to vector<1x8x128xf32>
    tpu.vector_store %arg4[%c0_6, %c0_7, %c0_8], %9 {strides = array<i32>} : memref<1x8x128xf32, #tpu.memory_space<vmem>>, vector<1x8x128xf32>,
    return
  }
  func.func @transform_0(%arg0: i32) -> (i32, i32, i32) {
    %c0_i32 = arith.constant 0 : i32
    %c0_i32_0 = arith.constant 0 : i32
    %c0_i32_1 = arith.constant 0 : i32
    return %arg0, %c0_i32, %c0_i32_0 : i32, i32, i32
  }
  func.func @transform_1(%arg0: i32) -> (i32, i32) {
    %c0_i32 = arith.constant 0 : i32
    %c0_i32_0 = arith.constant 0 : i32
    %c0_i32_1 = arith.constant 0 : i32
    return %c0_i32, %c0_i32_0 : i32, i32
  }
  func.func @transform_2(%arg0: i32) -> (i32, i32) {
    %c0_i32 = arith.constant 0 : i32
    %c0_i32_0 = arith.constant 0 : i32
    %c0_i32_1 = arith.constant 0 : i32
    return %c0_i32, %c0_i32_0 : i32, i32
  }
  func.func @transform_3(%arg0: i32) -> (i32, i32, i32) {
    %c0_i32 = arith.constant 0 : i32
    %c0_i32_0 = arith.constant 0 : i32
    %c0_i32_1 = arith.constant 0 : i32
    return %arg0, %c0_i32, %c0_i32_0 : i32, i32, i32
  }
}

</mosaic_0001>

<llo_original>
// kernel: tpu_custom_call.1
$region0: #{tpu_custom_call.1}
  #allocation0 [shape = 'u32[]', space=smem, size = 0x4, offset = 0x4, fixed_abs, tag = 'smem constant byte address 0x4 - core index']
  #allocation1 [shape = 'u32[144,128]{1,0:T(1,128)}', space=vmem, size = 0x12000, scoped, tag = 'internal scratch']
  %s0 = inlined_call_operand.hbm [shape: f32[2,16,128], index: 0, kind: input, shape index: {}]
  %s1 = inlined_call_operand.vmem [shape: f32[8,16], index: 1, kind: input, shape index: {}]
  %s2 = inlined_call_operand.vmem [shape: f32[8,1], index: 2, kind: input, shape index: {}]
  %s3 = inlined_call_operand.hbm [shape: f32[2,8,128], index: 3, kind: output, shape index: {}]
  %s4 = sld [smem:[#allocation0]]
  $region49: #{tpu_custom_call.1} parent=0
    _
  %s6 = ssub.s32 1, %s4
  %s7 = scalar_select 0, %s6, %s4
  $region1: #{tpu_custom_call.1} parent=0
    #allocation2 [shape = 'u8[16384]{0}', space=vmem, size = 0x4000, scoped, tag = 'input window, operand 0']
    #allocation3 [shape = 's32[2]{0}', space=sflag, size = 0x8, scoped, tag = 'scoped memory for tpu_custom_call.1']
    #allocation4 [shape = 's32[2]{0}', space=sflag, size = 0x8, scoped, tag = 'scoped memory for tpu_custom_call.1']
    #allocation5 [shape = 'u8[8192]{0}', space=vmem, size = 0x2000, scoped, tag = 'output window, operand 0']
    %8 = vsyncpa [#allocation3], 0
    %s9 = scalar_lea.sflag [#allocation3], 1
    %10 = vsyncpa %s9, 0
    %11 = vsyncpa [#allocation4], 0
    %s12 = scalar_lea.sflag [#allocation4], 1
    %13 = vsyncpa %s12, 0
    loop: start=0, step=1, limit=4
    $region2: #{tpu_custom_call.1} parent=1 // loop_pre_header
      _
    $region3: #{tpu_custom_call.1} parent=1 // loop_header
      %s15 = sphi 0, %s19
      %p16 = scmp.ge.s32.totalorder %s15, 4
      %s25 = sphi 0, %s27
      %s28 = sphi 0, %s25
      %s29 = sphi 0, %s28
      %s45 = sphi 0, %s29
      %s49 = sphi 0, %s49
      %s51 = sphi 0, %s49
      %s52 = sphi 0, %s51
      %s66 = sphi 0, %s52
      %s70 = sphi 0, %s70
      %s72 = sphi 0, %s70
      %s73 = sphi 0, %s72
      %s87 = sphi 0, %s73
      %s93 = sphi 0, %s95
      %s96 = sphi 0, %s93
      %s97 = sphi 0, %s96
      %s113 = sphi 0, %s97
    $region4: #{tpu_custom_call.1} parent=1 // loop_header_branch
      %18 = sbr.rel (%p16) target = $region8
    $region5: #{tpu_custom_call.1} parent=1 // loop_body
      %s20 = ssub.s32 %s15, 1
      %s21 = ssub.s32 %s15, 2
      %s22 = sadd.s32 %s15, 1
      %s23 = ssub.s32 %s15, %s22
      %p24 = scmp.eq.s32.totalorder %s23, 0
      %s26 = sadd.s32 %s25, 1
      %s27 = scalar_select %p24, %s25, %s26
      %p30 = pneg %p24
      %p31 = scmp.eq.s32.totalorder %s15, 1
      %p32 = por %p30, %p31
      %p33 = scmp.ne.s32.totalorder %s25, %s28
      %p34 = scmp.eq.s32.totalorder %s15, 0
      %p35 = por %p33, %p34
      %p36 = scmp.ne.s32.totalorder %s25, %s28
      %p37 = scmp.eq.s32.totalorder %s20, 1
      %p38 = por %p36, %p37
      %p39 = scmp.ne.s32.totalorder %s28, %s29
      %p40 = scmp.eq.s32.totalorder %s20, 0
      %p41 = por %p39, %p40
      %p42 = scmp.ne.s32.totalorder %s28, %s29
      %p43 = scmp.eq.s32.totalorder %s21, 1
      %p44 = por %p42, %p43
      %p46 = scmp.ne.s32.totalorder %s29, %s45
      %p47 = scmp.eq.s32.totalorder %s21, 0
      %p48 = por %p46, %p47
      %s50 = sadd.s32 %s49, 1
      %p53 = scmp.eq.s32.totalorder %s15, 1
      %p54 = scmp.ne.s32.totalorder %s49, %s51
      %p55 = scmp.eq.s32.totalorder %s15, 0
      %p56 = por %p54, %p55
      %p57 = scmp.ne.s32.totalorder %s49, %s51
      %p58 = scmp.eq.s32.totalorder %s20, 1
      %p59 = por %p57, %p58
      %p60 = scmp.ne.s32.totalorder %s51, %s52
      %p61 = scmp.eq.s32.totalorder %s20, 0
      %p62 = por %p60, %p61
      %p63 = scmp.ne.s32.totalorder %s51, %s52
      %p64 = scmp.eq.s32.totalorder %s21, 1
      %p65 = por %p63, %p64
      %p67 = scmp.ne.s32.totalorder %s52, %s66
      %p68 = scmp.eq.s32.totalorder %s21, 0
      %p69 = por %p67, %p68
      %s71 = sadd.s32 %s70, 1
      %p74 = scmp.eq.s32.totalorder %s15, 1
      %p75 = scmp.ne.s32.totalorder %s70, %s72
      %p76 = scmp.eq.s32.totalorder %s15, 0
      %p77 = por %p75, %p76
      %p78 = scmp.ne.s32.totalorder %s70, %s72
      %p79 = scmp.eq.s32.totalorder %s20, 1
      %p80 = por %p78, %p79
      %p81 = scmp.ne.s32.totalorder %s72, %s73
      %p82 = scmp.eq.s32.totalorder %s20, 0
      %p83 = por %p81, %p82
      %p84 = scmp.ne.s32.totalorder %s72, %s73
      %p85 = scmp.eq.s32.totalorder %s21, 1
      %p86 = por %p84, %p85
      %p88 = scmp.ne.s32.totalorder %s73, %s87
      %p89 = scmp.eq.s32.totalorder %s21, 0
      %p90 = por %p88, %p89
      %s91 = ssub.s32 %s15, %s22
      %p92 = scmp.eq.s32.totalorder %s91, 0
      %s94 = sadd.s32 %s93, 1
      %s95 = scalar_select %p92, %s93, %s94
      %p98 = pneg %p92
      %p99 = scmp.eq.s32.totalorder %s15, 1
      %p100 = por %p98, %p99
      %p101 = scmp.ne.s32.totalorder %s93, %s96
      %p102 = scmp.eq.s32.totalorder %s15, 0
      %p103 = por %p101, %p102
      %p104 = scmp.ne.s32.totalorder %s93, %s96
      %p105 = scmp.eq.s32.totalorder %s20, 1
      %p106 = por %p104, %p105
      %p107 = scmp.ne.s32.totalorder %s96, %s97
      %p108 = scmp.eq.s32.totalorder %s20, 0
      %p109 = por %p107, %p108
      %p110 = scmp.ne.s32.totalorder %s96, %s97
      %p111 = scmp.eq.s32.totalorder %s21, 1
      %p112 = por %p110, %p111
      %p114 = scmp.ne.s32.totalorder %s97, %s113
      %p115 = scmp.eq.s32.totalorder %s21, 0
      %p116 = por %p114, %p115
      %p117 = scmp.le.s32.totalorder 1, %s15
      %p118 = scmp.lt.s32.totalorder %s15, 3
      %p119 = pnand %p117, %p118
      %p120 = pneg %p119
      // Predicated region
      $region9: #{tpu_custom_call.1} parent=5 // pred_check
        _
      $region10: #{tpu_custom_call.1} parent=5 // pred_check_branch
        %122 = sbr.rel (%p119) target = $region12
      $region11: #{tpu_custom_call.1} parent=5 // pred_region
        %s123 = ssub.s32 %s15, 1
        // Predicated region
        $region13: #{tpu_custom_call.1} parent=11 // pred_check
          %p124 = pneg %p62
        $region14: #{tpu_custom_call.1} parent=11 // pred_check_branch
          %126 = sbr.rel (%p124) target = $region16
        $region15: #{tpu_custom_call.1} parent=11 // pred_region
          _
        $region16: #{tpu_custom_call.1} parent=11 // pred_fallthru
          _
        // Predicated region
        $region17: #{tpu_custom_call.1} parent=11 // pred_check
          %p127 = pneg %p83
        $region18: #{tpu_custom_call.1} parent=11 // pred_check_branch
          %129 = sbr.rel (%p127) target = $region20
        $region19: #{tpu_custom_call.1} parent=11 // pred_region
          _
        $region20: #{tpu_custom_call.1} parent=11 // pred_fallthru
          _
      $region12: #{tpu_custom_call.1} parent=5 // pred_fallthru
        _
      %p130 = scmp.lt.s32.totalorder %s15, 2
      // Predicated region
      $region21: #{tpu_custom_call.1} parent=5 // pred_check
        %p131 = pneg %p130
      $region22: #{tpu_custom_call.1} parent=5 // pred_check_branch
        %133 = sbr.rel (%p131) target = $region24
      $region23: #{tpu_custom_call.1} parent=5 // pred_region
        // Predicated region
        $region25: #{tpu_custom_call.1} parent=23 // pred_check
          %p134 = pneg %p35
        $region26: #{tpu_custom_call.1} parent=23 // pred_check_branch
          %136 = sbr.rel (%p134) target = $region28
        $region27: #{tpu_custom_call.1} parent=23 // pred_region
          %s137 = sand.u32 %s25, 1
          %s138 = scalar_lea.sflag [#allocation3], %s137
          %s139 = sand.u32 %s25, 1
          %s140 = smul.addr %s139, 16
          %s141 = scalar_lea.vmem [#allocation2], %s140
          %s143 = ssub.s32 256, 256
          %144 = vsyncadd %s138, %s143
          %s145 = smul.addr %s15, 2
          %s146 = smul.addr %s145, 128
          %s147 = scalar_lea.hbm %s0, %s146
          %s148 = sshll.u32 %s141, 4
          %s149 = int_to_ptr.vmem [resolvable:$true] %s148
          %154 = dma.hbm_to_vmem [thread:$0]  %s147, 256, %s149, %s138, 128, 128, 8
        $region28: #{tpu_custom_call.1} parent=23 // pred_fallthru
          _
      $region24: #{tpu_custom_call.1} parent=5 // pred_fallthru
        _
      %p155 = scmp.le.s32.totalorder 1, %s15
      %p156 = scmp.lt.s32.totalorder %s15, 3
      %p157 = pnand %p155, %p156
      %p158 = pneg %p157
      // Predicated region
      $region29: #{tpu_custom_call.1} parent=5 // pred_check
        _
      $region30: #{tpu_custom_call.1} parent=5 // pred_check_branch
        %160 = sbr.rel (%p157) target = $region32
      $region31: #{tpu_custom_call.1} parent=5 // pred_region
        %s161 = ssub.s32 %s15, 1
        %s162 = sand.u32 %s28, 1
        %s163 = scalar_lea.sflag [#allocation3], %s162
        %s164 = sand.u32 %s28, 1
        %s165 = smul.addr %s164, 16
        %s166 = scalar_lea.vmem [#allocation2], %s165
        // Predicated region
        $region33: #{tpu_custom_call.1} parent=31 // pred_check
          %p167 = pneg %p41
        $region34: #{tpu_custom_call.1} parent=31 // pred_check_branch
          %169 = sbr.rel (%p167) target = $region36
        $region35: #{tpu_custom_call.1} parent=31 // pred_region
          %170 = dma.done %s163, 256
        $region36: #{tpu_custom_call.1} parent=31 // pred_fallthru
          _
        %s171 = sand.u32 %s28, 1
        %s172 = scalar_lea.sflag [#allocation3], %s171
        %s173 = sand.u32 %s28, 1
        %s174 = smul.addr %s173, 16
        %s175 = scalar_lea.vmem [#allocation2], %s174
        %p176 = pneg %p41
        %p177 = pneg %p38
        %p178 = pneg %p62
        %p179 = pneg %p59
        %p180 = pneg %p83
        %p181 = pneg %p80
        %p182 = pneg %p109
        %p183 = pneg %p106
        %s184 = sand.u32 %s96, 1
        %s185 = scalar_lea.sflag [#allocation4], %s184
        %s186 = sand.u32 %s96, 1
        %s187 = smul.addr %s186, 8
        %s188 = scalar_lea.vmem [#allocation5], %s187
        %v189 = vld [vmem:[%s1] sm:$0xff]
        %v190 = vld [vmem:[%s166] sm:$0xff]
        %v191 = vld [vmem:[%s166 + $0x8] sm:$0xff]
        %v192 = vld [vmem:[%s2] sm:$0xff]
        %194 = vset.pattern.permute.xlu0 0
        %195 = vperm.xlu0 %194, %v192
        %v196 = vpop.permute.xlu0 %195
        %vm198 = vcmask 130048
        %v200 = vsel %vm198, %v189, 0
        %202 = vmatprep.subr.mxu0 0.0
        %203 = vmatpush1.msra.mxu0 %v190
        %204 = vmatprep.subr.mxu0 0.0
        %205 = vmatpush1.msra.mxu0 %v191
        %206 = vmatprep.subr.mxu0 0.0
        %207 = vmatpush1.msra.mxu0 0.0
        %208 = vmatprep.subr.mxu0 0.0
        %209 = vmatpush1.msra.mxu0 0.0
        %210 = vmatprep.subr.mxu0 0.0
        %211 = vmatpush1.msra.mxu0 0.0
        %212 = vmatprep.subr.mxu0 0.0
        %213 = vmatpush1.msra.mxu0 0.0
        %214 = vmatprep.subr.mxu0 0.0
        %215 = vmatpush1.msra.mxu0 0.0
        %216 = vmatprep.subr.mxu0 0.0
        %217 = vmatpush1.msra.mxu0 0.0
        %218 = vmatprep.subr.mxu0 0.0
        %219 = vmatpush1.msra.mxu0 0.0
        %220 = vmatprep.subr.mxu0 0.0
        %221 = vmatpush1.msra.mxu0 0.0
        %222 = vmatprep.subr.mxu0 0.0
        %223 = vmatpush1.msra.mxu0 0.0
        %224 = vmatprep.subr.mxu0 0.0
        %225 = vmatpush1.msra.mxu0 0.0
        %226 = vmatprep.subr.mxu0 0.0
        %227 = vmatpush1.msra.mxu0 0.0
        %228 = vmatprep.subr.mxu0 0.0
        %229 = vmatpush1.msra.mxu0 0.0
        %230 = vmatprep.subr.mxu0 0.0
        %231 = vmatpush1.msra.mxu0 0.0
        %232 = vmatprep.subr.mxu0 0.0
        %233 = vmatpush1.msra.mxu0 0.0
        %234 = vmatprep.subr.mxu0 0.0
        %235 = vmatpush1.msra.mxu0 0.0
        %236 = vmatprep.subr.mxu0 0.0
        %237 = vmatpush1.msra.mxu0 0.0
        %238 = vmatprep.subr.mxu0 0.0
        %239 = vmatpush1.msra.mxu0 0.0
        %240 = vmatprep.subr.mxu0 0.0
        %241 = vmatpush1.msra.mxu0 0.0
        %242 = vmatprep.subr.mxu0 0.0
        %243 = vmatpush1.msra.mxu0 0.0
        %244 = vmatprep.subr.mxu0 0.0
        %245 = vmatpush1.msra.mxu0 0.0
        %246 = vmatprep.subr.mxu0 0.0
        %247 = vmatpush1.msra.mxu0 0.0
        %248 = vmatprep.subr.mxu0 0.0
        %249 = vmatpush1.msra.mxu0 0.0
        %250 = vmatprep.subr.mxu0 0.0
        %251 = vmatpush1.msra.mxu0 0.0
        %252 = vmatprep.subr.mxu0 0.0
        %253 = vmatpush1.msra.mxu0 0.0
        %254 = vmatprep.subr.mxu0 0.0
        %255 = vmatpush1.msra.mxu0 0.0
        %256 = vmatprep.subr.mxu0 0.0
        %257 = vmatpush1.msra.mxu0 0.0
        %258 = vmatprep.subr.mxu0 0.0
        %259 = vmatpush1.msra.mxu0 0.0
        %260 = vmatprep.subr.mxu0 0.0
        %261 = vmatpush1.msra.mxu0 0.0
        %262 = vmatprep.subr.mxu0 0.0
        %263 = vmatpush1.msra.mxu0 0.0
        %264 = vmatprep.subr.mxu0 0.0
        %265 = vmatpush1.msra.mxu0 0.0
        %266 = vmatprep.mubr.f32.mxu0 0.0
        %267 = vmatmul.mubr.f32.gmra.mrb[0].mxu0 %v200
        %v268 = vpop.f32.mrb[0].mxu0
        %v269 = vadd.f32 %v196, %v268
        %v270 = vpop.f32.mrb[0].mxu0
        %271 = vdwg.mxu0
        %272 = vst [vmem:[%s188] sm:$0xff] %v269
        %s273 = sand.u32 %s96, 1
        %s274 = scalar_lea.sflag [#allocation4], %s273
        %s275 = sand.u32 %s96, 1
        %s276 = smul.addr %s275, 8
        %s277 = scalar_lea.vmem [#allocation5], %s276
        // Predicated region
        $region37: #{tpu_custom_call.1} parent=31 // pred_check
          %p278 = pneg %p106
        $region38: #{tpu_custom_call.1} parent=31 // pred_check_branch
          %280 = sbr.rel (%p278) target = $region40
        $region39: #{tpu_custom_call.1} parent=31 // pred_region
          %s282 = ssub.s32 128, 128
          %283 = vsyncadd %s274, %s282
          %s284 = smul.addr %s20, 128
          %s285 = scalar_lea.hbm %s3, %s284
          %s287 = sshll.u32 %s277, 4
          %s288 = int_to_ptr.vmem [resolvable:$true] %s287
          %290 = dma.vmem_to_hbm [thread:$0]  %s288, 128, %s285, %s274
        $region40: #{tpu_custom_call.1} parent=31 // pred_fallthru
          _
      $region32: #{tpu_custom_call.1} parent=5 // pred_fallthru
        _
      %p291 = scmp.le.s32.totalorder 2, %s15
      // Predicated region
      $region41: #{tpu_custom_call.1} parent=5 // pred_check
        %p292 = pneg %p291
      $region42: #{tpu_custom_call.1} parent=5 // pred_check_branch
        %294 = sbr.rel (%p292) target = $region44
      $region43: #{tpu_custom_call.1} parent=5 // pred_region
        %s295 = ssub.s32 %s15, 2
        // Predicated region
        $region45: #{tpu_custom_call.1} parent=43 // pred_check
          %p296 = pneg %p112
        $region46: #{tpu_custom_call.1} parent=43 // pred_check_branch
          %298 = sbr.rel (%p296) target = $region48
        $region47: #{tpu_custom_call.1} parent=43 // pred_region
          %s299 = sand.u32 %s97, 1
          %s300 = scalar_lea.sflag [#allocation4], %s299
          %s301 = sand.u32 %s97, 1
          %s302 = smul.addr %s301, 8
          %s303 = scalar_lea.vmem [#allocation5], %s302
          %304 = dma.done %s300, 128
        $region48: #{tpu_custom_call.1} parent=43 // pred_fallthru
          _
      $region44: #{tpu_custom_call.1} parent=5 // pred_fallthru
        _
    $region6: #{tpu_custom_call.1} parent=1 // loop_footer
      %s19 = sadd.s32 1, %s15
    $region7: #{tpu_custom_call.1} parent=1 // loop_footer_branch
      %14 = sbr.rel target = $region3
    $region8: #{tpu_custom_call.1} parent=1 // loop_exit
      _
    %305 = vsyncpa [#allocation3], 1
    %s306 = scalar_lea.sflag [#allocation3], 1
    %307 = vsyncpa %s306, 1
    %308 = vsyncpa [#allocation4], 1
    %s309 = scalar_lea.sflag [#allocation4], 1
    %310 = vsyncpa %s309, 1

</llo_original>
